<compile_context>
chip_gen: v7x
topology: tpu7x:2x2x1
jax: 0.10.0
libtpu: 0.0.40
codegen_flags: <defaults>
</compile_context>

<pallas_src>
import jax
import jax.numpy as jnp
from jax import lax
from jax.experimental import pallas as pl
from jax.experimental.pallas import tpu as pltpu


def _round_up(n, m):
    return ((n + m - 1) // m) * m


# dot_general dims for  lhs (O, K) contract rhs (TB, K)  ->  (O, TB)
# (same TRANS_B pattern as the flash-attention q @ k^T kernels).
_TRANS_B_DIMS = (((1,), (1,)), ((), ()))


def swallow_critic_kernel(x_ref, w1_ref, b1_ref, w2_ref, b2_ref, w3_ref, b3_ref,
                          out_ref):
    # layer1: (TB, D) @ (D, 64) on the MXU (bf16 operands if x is bf16),
    # f32 accumulation; bias + ReLU on the VPU in f32.
    h1 = jnp.dot(x_ref[...], w1_ref[...], preferred_element_type=jnp.float32)
    h1 = jnp.maximum(h1 + b1_ref[...], 0.0)

    # layer2: (TB, 64) @ (64, 32); MXU fed in the weight dtype, f32 accumulate.
    h2 = jnp.dot(h1.astype(w2_ref.dtype), w2_ref[...],
                 preferred_element_type=jnp.float32)
    h2 = jnp.maximum(h2 + b2_ref[...], 0.0)

    # critic head, lane-dense: (O, 32) x (TB, 32)^T -> (O, TB).  Batch ends up
    # on the lane axis, so the output block (1, O, TB) is stored with unmasked
    # full-lane vst and needs no lane-padded VMEM buffer.
    y = lax.dot_general(w3_ref[...], h2, _TRANS_B_DIMS,
                        preferred_element_type=jnp.float32) + b3_ref[...]
    out_ref[...] = y[None].astype(out_ref.dtype)


def swallow_critic_forward(x, params, *, block_b=4096):
    """x: (B, D_in) float32 or bfloat16.
    params: W1 (D,64), b1 (1,64), W2 (64,32), b2 (1,32),
            W3 (out_dim,32) [torch layout], b3 (out_dim,1).
    Returns (B, out_dim) float32."""
    B, d_in = x.shape
    out_dim, k3 = params["W3"].shape
    assert params["W1"].shape == (d_in, 64)
    assert params["W2"].shape == (64, 32) and k3 == 32
    assert params["b3"].shape == (out_dim, 1)

    if x.dtype not in (jnp.float32, jnp.bfloat16):
        x = x.astype(jnp.float32)
    # bf16 MXU operands only when x is already bf16 (no extra HBM cast pass).
    mxu_dtype = x.dtype

    # Batch tile: as large as block_b (amortize the ~0.35us per-step pipeline
    # overhead), but keep >=4 tiles of >=256 rows when B allows so v7x's two
    # TensorCores split the grid and each still double-buffers.
    tb = min(block_b, _round_up(B, 8))
    quarter = _round_up(pl.cdiv(B, 4), 128)
    if quarter >= 256:
        tb = min(tb, quarter)
    num_tiles = pl.cdiv(B, tb)
    b_pad = num_tiles * tb
    # Note: no jnp.pad of x.  If B % tb != 0 the last x block is a partial
    # tile; Pallas clamps the DMA and the stale tail rows only produce garbage
    # output rows beyond B, which are sliced off below (each output row depends
    # solely on its own input row).

    w1 = params["W1"].astype(mxu_dtype)
    w2 = params["W2"].astype(mxu_dtype)
    b1 = params["b1"].astype(jnp.float32)
    b2 = params["b2"].astype(jnp.float32)
    w3 = params["W3"].astype(jnp.float32)
    b3 = params["b3"].astype(jnp.float32)

    # Same block index every grid step -> fetched once, VMEM-resident.
    def resident(a):
        return pl.BlockSpec(a.shape, lambda i: (0, 0))

    flops = 2 * B * (d_in * 64 + 64 * 32 + 32 * out_dim)
    bytes_accessed = (
        x.size * x.dtype.itemsize
        + b_pad * out_dim * 4
        + sum(a.size * a.dtype.itemsize for a in (w1, b1, w2, b2, w3, b3)))

    out = pl.pallas_call(
        swallow_critic_kernel,
        out_shape=jax.ShapeDtypeStruct((num_tiles, out_dim, tb), jnp.float32),
        grid_spec=pltpu.PrefetchScalarGridSpec(
            num_scalar_prefetch=0,
            grid=(num_tiles,),
            in_specs=[
                pl.BlockSpec((tb, d_in), lambda i: (i, 0)),   # x tile, pipelined
                resident(w1), resident(b1),
                resident(w2), resident(b2),
                resident(w3), resident(b3),
            ],
            out_specs=pl.BlockSpec((1, out_dim, tb), lambda i: (i, 0, 0)),
        ),
        compiler_params=pltpu.CompilerParams(
            dimension_semantics=("parallel",)),   # megacore batch split on v7x
        cost_estimate=pl.CostEstimate(flops=flops, transcendentals=0,
                                      bytes_accessed=bytes_accessed),
    )(x, w1, b1, w2, b2, w3, b3)

    # (num_tiles, out_dim, tb) -> (b_pad, out_dim), drop the padded tail rows.
    out = jnp.moveaxis(out, 1, 2).reshape(b_pad, out_dim)
    return out[:B]


def init_params(key, input_dim, output_dim=1):
    """Deterministic init mimicking torch.nn.Linear default (uniform +-1/sqrt(fan_in))."""
    def uniform(k, shape, fan_in):
        bound = 1.0 / jnp.sqrt(fan_in)
        return jax.random.uniform(k, shape, jnp.float32, -bound, bound)

    k1, k2, k3 = jax.random.split(key, 3)
    k1w, k1b = jax.random.split(k1)
    k2w, k2b = jax.random.split(k2)
    k3w, k3b = jax.random.split(k3)
    return {
        # hidden layers stored as (fan_in, fan_out) == torch weight transposed
        "W1": uniform(k1w, (input_dim, 64), input_dim),
        "b1": uniform(k1b, (1, 64), input_dim),
        "W2": uniform(k2w, (64, 32), 64),
        "b2": uniform(k2b, (1, 32), 64),
        # critic head kept in torch layout (out_dim, 32); bias as column (out_dim, 1)
        "W3": uniform(k3w, (output_dim, 32), 32),
        "b3": uniform(k3b, (output_dim, 1), 32),
    }


if __name__ == "__main__":
    key = jax.random.PRNGKey(0)
    k_x, k_p = jax.random.split(key)

    d_in = 32                       # input_shape = (32,)
    params = init_params(k_p, d_in, output_dim=1)

    def reference(x, p):
        h = jnp.maximum(x.astype(jnp.float32) @ p["W1"] + p["b1"], 0.0)
        h = jnp.maximum(h @ p["W2"] + p["b2"], 0.0)
        return h @ p["W3"].T + p["b3"].T

    # Case 1: tiny batch -> single grid step, block == full array.
    x_small = jax.random.normal(k_x, (8, d_in), jnp.float32)
    out_small = jax.block_until_ready(swallow_critic_forward(x_small, params))
    assert out_small.shape == (8, 1)
    assert jnp.allclose(out_small, reference(x_small, params), atol=1e-4, rtol=1e-4)

    # Case 2: batched, non-divisible batch -> 4 pipelined tiles, partial last
    # tile handled without any wrapper-side padding copy.
    x_big = jax.random.normal(k_x, (200, d_in), jnp.float32)
    out_big = jax.block_until_ready(
        swallow_critic_forward(x_big, params, block_b=64))
    assert out_big.shape == (200, 1)
    assert jnp.allclose(out_big, reference(x_big, params), atol=1e-4, rtol=1e-4)

    # Case 3: x already bf16 end-to-end -> bf16 MXU operands, f32 accumulation.
    x_bf16 = x_big.astype(jnp.bfloat16)
    out_bf16 = jax.block_until_ready(
        swallow_critic_forward(x_bf16, params, block_b=64))
    assert out_bf16.shape == (200, 1)
    assert jnp.allclose(out_bf16, reference(x_big, params), atol=5e-2, rtol=5e-2)

    print("KERNEL_OK")
</pallas_src>

<mosaic_0001>
module attributes {stable_mosaic.version = 11 : i64} {
  func.func @swallow_critic_kernel(%arg0: i32, %arg1: memref<8x32xf32, #tpu.memory_space<vmem>>, %arg2: memref<32x64xf32, #tpu.memory_space<vmem>>, %arg3: memref<1x64xf32, #tpu.memory_space<vmem>>, %arg4: memref<64x32xf32, #tpu.memory_space<vmem>>, %arg5: memref<1x32xf32, #tpu.memory_space<vmem>>, %arg6: memref<1x32xf32, #tpu.memory_space<vmem>>, %arg7: memref<1x1xf32, #tpu.memory_space<vmem>>, %arg8: memref<1x1x8xf32, #tpu.memory_space<vmem>>) attributes {dimension_semantics = [#tpu.dimension_semantics<parallel>], iteration_bounds = array<i64: 1>, scalar_prefetch = 0 : i64, scratch_operands = 0 : i64, tpu.core_type = #tpu.core_type<tc>, window_params = [{transform_indices = @transform_0, window_bounds = array<i64: 8, 32>}, {pipeline_mode = #tpu.pipeline_mode<synchronous>, transform_indices = @transform_1, window_bounds = array<i64: 32, 64>}, {pipeline_mode = #tpu.pipeline_mode<synchronous>, transform_indices = @transform_2, window_bounds = array<i64: 1, 64>}, {pipeline_mode = #tpu.pipeline_mode<synchronous>, transform_indices = @transform_3, window_bounds = array<i64: 64, 32>}, {pipeline_mode = #tpu.pipeline_mode<synchronous>, transform_indices = @transform_4, window_bounds = array<i64: 1, 32>}, {pipeline_mode = #tpu.pipeline_mode<synchronous>, transform_indices = @transform_5, window_bounds = array<i64: 1, 32>}, {pipeline_mode = #tpu.pipeline_mode<synchronous>, transform_indices = @transform_6, window_bounds = array<i64: 1, 1>}, {transform_indices = @transform_7, window_bounds = array<i64: 1, 1, 8>}]} {
    %c0 = arith.constant 0 : index
    %c0_0 = arith.constant 0 : index
    %0 = vector.load %arg1[%c0, %c0_0] : memref<8x32xf32, #tpu.memory_space<vmem>>, vector<8x32xf32>
    %c0_1 = arith.constant 0 : index
    %c0_2 = arith.constant 0 : index
    %1 = vector.load %arg2[%c0_1, %c0_2] : memref<32x64xf32, #tpu.memory_space<vmem>>, vector<32x64xf32>
    %cst = arith.constant dense<0.000000e+00> : vector<8x64xf32>
    %2 = tpu.matmul %0, %1, %cst {dimension_numbers = #tpu.dot_dimension_numbers<[1], [0], [0], [1], [0, 0, 1, 1], [], []>} : vector<8x32xf32>, vector<32x64xf32>, vector<8x64xf32> -> vector<8x64xf32>
    %c0_3 = arith.constant 0 : index
    %c0_4 = arith.constant 0 : index
    %3 = vector.load %arg3[%c0_3, %c0_4] : memref<1x64xf32, #tpu.memory_space<vmem>>, vector<1x64xf32>
    %4 = vector.broadcast %3 : vector<1x64xf32> to vector<8x64xf32>
    %5 = arith.addf %2, %4 : vector<8x64xf32>
    %cst_5 = arith.constant 0.000000e+00 : f32
    %6 = vector.broadcast %cst_5 : f32 to vector<8x64xf32>
    %7 = arith.maximumf %5, %6 : vector<8x64xf32>
    %c0_6 = arith.constant 0 : index
    %c0_7 = arith.constant 0 : index
    %8 = vector.load %arg4[%c0_6, %c0_7] : memref<64x32xf32, #tpu.memory_space<vmem>>, vector<64x32xf32>
    %cst_8 = arith.constant dense<0.000000e+00> : vector<8x32xf32>
    %9 = tpu.matmul %7, %8, %cst_8 {dimension_numbers = #tpu.dot_dimension_numbers<[1], [0], [0], [1], [0, 0, 1, 1], [], []>} : vector<8x64xf32>, vector<64x32xf32>, vector<8x32xf32> -> vector<8x32xf32>
    %c0_9 = arith.constant 0 : index
    %c0_10 = arith.constant 0 : index
    %10 = vector.load %arg5[%c0_9, %c0_10] : memref<1x32xf32, #tpu.memory_space<vmem>>, vector<1x32xf32>
    %11 = vector.broadcast %10 : vector<1x32xf32> to vector<8x32xf32>
    %12 = arith.addf %9, %11 : vector<8x32xf32>
    %cst_11 = arith.constant 0.000000e+00 : f32
    %13 = vector.broadcast %cst_11 : f32 to vector<8x32xf32>
    %14 = arith.maximumf %12, %13 : vector<8x32xf32>
    %c0_12 = arith.constant 0 : index
    %c0_13 = arith.constant 0 : index
    %15 = vector.load %arg6[%c0_12, %c0_13] : memref<1x32xf32, #tpu.memory_space<vmem>>, vector<1x32xf32>
    %cst_14 = arith.constant dense<0.000000e+00> : vector<1x8xf32>
    %16 = tpu.matmul %15, %14, %cst_14 {dimension_numbers = #tpu.dot_dimension_numbers<[1], [1], [0], [0], [0, 0, 1, 0], [], []>} : vector<1x32xf32>, vector<8x32xf32>, vector<1x8xf32> -> vector<1x8xf32>
    %c0_15 = arith.constant 0 : index
    %c0_16 = arith.constant 0 : index
    %17 = vector.load %arg7[%c0_15, %c0_16] : memref<1x1xf32, #tpu.memory_space<vmem>>, vector<1x1xf32>
    %18 = vector.broadcast %17 : vector<1x1xf32> to vector<1x8xf32>
    %19 = arith.addf %16, %18 : vector<1x8xf32>
    %20 = vector.shape_cast %19 : vector<1x8xf32> to vector<1x1x8xf32>
    %c0_17 = arith.constant 0 : index
    %c0_18 = arith.constant 0 : index
    %c0_19 = arith.constant 0 : index
    %21 = vector.load %arg8[%c0_17, %c0_18, %c0_19] : memref<1x1x8xf32, #tpu.memory_space<vmem>>, vector<1x1x8xf32>
    tpu.vector_store %arg8[%c0_17, %c0_18, %c0_19], %20 {strides = array<i32>} : memref<1x1x8xf32, #tpu.memory_space<vmem>>, vector<1x1x8xf32>,
    return
  }
  func.func @transform_0(%arg0: i32) -> (i32, i32) {
    %c0_i32 = arith.constant 0 : i32
    %c0_i32_0 = arith.constant 0 : i32
    return %arg0, %c0_i32 : i32, i32
  }
  func.func @transform_1(%arg0: i32) -> (i32, i32) {
    %c0_i32 = arith.constant 0 : i32
    %c0_i32_0 = arith.constant 0 : i32
    %c0_i32_1 = arith.constant 0 : i32
    return %c0_i32, %c0_i32_0 : i32, i32
  }
  func.func @transform_2(%arg0: i32) -> (i32, i32) {
    %c0_i32 = arith.constant 0 : i32
    %c0_i32_0 = arith.constant 0 : i32
    %c0_i32_1 = arith.constant 0 : i32
    return %c0_i32, %c0_i32_0 : i32, i32
  }
  func.func @transform_3(%arg0: i32) -> (i32, i32) {
    %c0_i32 = arith.constant 0 : i32
    %c0_i32_0 = arith.constant 0 : i32
    %c0_i32_1 = arith.constant 0 : i32
    return %c0_i32, %c0_i32_0 : i32, i32
  }
  func.func @transform_4(%arg0: i32) -> (i32, i32) {
    %c0_i32 = arith.constant 0 : i32
    %c0_i32_0 = arith.constant 0 : i32
    %c0_i32_1 = arith.constant 0 : i32
    return %c0_i32, %c0_i32_0 : i32, i32
  }
  func.func @transform_5(%arg0: i32) -> (i32, i32) {
    %c0_i32 = arith.constant 0 : i32
    %c0_i32_0 = arith.constant 0 : i32
    %c0_i32_1 = arith.constant 0 : i32
    return %c0_i32, %c0_i32_0 : i32, i32
  }
  func.func @transform_6(%arg0: i32) -> (i32, i32) {
    %c0_i32 = arith.constant 0 : i32
    %c0_i32_0 = arith.constant 0 : i32
    %c0_i32_1 = arith.constant 0 : i32
    return %c0_i32, %c0_i32_0 : i32, i32
  }
  func.func @transform_7(%arg0: i32) -> (i32, i32, i32) {
    %c0_i32 = arith.constant 0 : i32
    %c0_i32_0 = arith.constant 0 : i32
    %c0_i32_1 = arith.constant 0 : i32
    return %arg0, %c0_i32, %c0_i32_0 : i32, i32, i32
  }
}

</mosaic_0001>

<llo_original>
// kernel: tpu_custom_call.1
$region0: #{tpu_custom_call.1}
  #allocation0 [shape = 'u32[]', space=smem, size = 0x4, offset = 0x4, fixed_abs, tag = 'smem constant byte address 0x4 - core index']
  #allocation1 [shape = 'u32[144,128]{1,0:T(1,128)}', space=vmem, size = 0x12000, scoped, tag = 'internal scratch']
  #allocation2 [shape = 'f32[1,1]{1,0:T(1,128)S(1)}', space=vmem, size = 0x200, scoped, tag = 'scoped memory for tpu_custom_call.1']
  %s0 = inlined_call_operand.vmem [shape: f32[8,32], index: 0, kind: input, shape index: {}]
  %s1 = inlined_call_operand.vmem [shape: f32[32,64], index: 1, kind: input, shape index: {}]
  %s2 = inlined_call_operand.vmem [shape: f32[1,64], index: 2, kind: input, shape index: {}]
  %s3 = inlined_call_operand.vmem [shape: f32[64,32], index: 3, kind: input, shape index: {}]
  %s4 = inlined_call_operand.vmem [shape: f32[1,32], index: 4, kind: input, shape index: {}]
  %s5 = inlined_call_operand.vmem [shape: f32[1,32], index: 5, kind: input, shape index: {}]
  %s6 = inlined_call_operand.<no memory space> [shape: f32[1,1], index: 6, kind: input, shape index: {}]
  %s7 = inlined_call_operand.hbm [shape: f32[1,1,8], index: 7, kind: output, shape index: {}]
  %s8 = sld [smem:[#allocation0]]
  $region38: #{tpu_custom_call.1} parent=0
    _
  %s10 = ssub.s32 1, %s8
  %s11 = scalar_select 0, %s10, %s8
  %v12 = vstv %s6
  %13 = vst [vmem:[#allocation2] sm:$0x1] %v12
  $region1: #{tpu_custom_call.1} parent=0
    #allocation3 [shape = 'u8[512]{0}', space=vmem, size = 0x400, scoped, tag = 'output window, operand 0, single buffered']
    #allocation4 [shape = 's32[1]{0}', space=sflag, size = 0x4, scoped, tag = 'scoped memory for tpu_custom_call.1']
    %14 = vsyncpa [#allocation4], 0
    // Predicated region
    $region2: #{tpu_custom_call.1} parent=1 // pred_check
      _
    $region3: #{tpu_custom_call.1} parent=1 // pred_check_branch
      %16 = sbr.rel (0) target = $region5
    $region4: #{tpu_custom_call.1} parent=1 // pred_region
      _
    $region5: #{tpu_custom_call.1} parent=1 // pred_fallthru
      _
    // Predicated region
    $region6: #{tpu_custom_call.1} parent=1 // pred_check
      _
    $region7: #{tpu_custom_call.1} parent=1 // pred_check_branch
      %18 = sbr.rel (0) target = $region9
    $region8: #{tpu_custom_call.1} parent=1 // pred_region
      _
    $region9: #{tpu_custom_call.1} parent=1 // pred_fallthru
      _
    // Predicated region
    $region10: #{tpu_custom_call.1} parent=1 // pred_check
      _
    $region11: #{tpu_custom_call.1} parent=1 // pred_check_branch
      %20 = sbr.rel (0) target = $region13
    $region12: #{tpu_custom_call.1} parent=1 // pred_region
      _
    $region13: #{tpu_custom_call.1} parent=1 // pred_fallthru
      _
    // Predicated region
    $region14: #{tpu_custom_call.1} parent=1 // pred_check
      _
    $region15: #{tpu_custom_call.1} parent=1 // pred_check_branch
      %22 = sbr.rel (0) target = $region17
    $region16: #{tpu_custom_call.1} parent=1 // pred_region
      _
    $region17: #{tpu_custom_call.1} parent=1 // pred_fallthru
      _
    // Predicated region
    $region18: #{tpu_custom_call.1} parent=1 // pred_check
      _
    $region19: #{tpu_custom_call.1} parent=1 // pred_check_branch
      %24 = sbr.rel (0) target = $region21
    $region20: #{tpu_custom_call.1} parent=1 // pred_region
      _
    $region21: #{tpu_custom_call.1} parent=1 // pred_fallthru
      _
    // Predicated region
    $region22: #{tpu_custom_call.1} parent=1 // pred_check
      _
    $region23: #{tpu_custom_call.1} parent=1 // pred_check_branch
      %26 = sbr.rel (0) target = $region25
    $region24: #{tpu_custom_call.1} parent=1 // pred_region
      _
    $region25: #{tpu_custom_call.1} parent=1 // pred_fallthru
      _
    // Predicated region
    $region26: #{tpu_custom_call.1} parent=1 // pred_check
      _
    $region27: #{tpu_custom_call.1} parent=1 // pred_check_branch
      %28 = sbr.rel (0) target = $region29
    $region28: #{tpu_custom_call.1} parent=1 // pred_region
      _
    $region29: #{tpu_custom_call.1} parent=1 // pred_fallthru
      _
    %v29 = vld [vmem:[%s0] sm:$0xff]
    %v30 = vld [vmem:[%s1] sm:$0xff]
    %v31 = vld [vmem:[%s1 + $0x8] sm:$0xff]
    %v32 = vld [vmem:[%s1 + $0x10] sm:$0xff]
    %v33 = vld [vmem:[%s1 + $0x18] sm:$0xff]
    %v34 = vld [vmem:[%s2] sm:$0x1]
    %v36 = vlaneseq
    %v37 = vshrl.u32 %v36, 7
    %v38 = vsub.s32 0, %v37
    %v39 = vrot.slane %v34, %v38
    %vm41 = vcmask 261120
    %v43 = vsel %vm41, %v29, 0
    %45 = vmatprep.subr.mxu0 0.0
    %46 = vmatpush1.msra.mxu0 %v30
    %47 = vmatprep.subr.mxu0 0.0
    %48 = vmatpush1.msra.mxu0 %v31
    %49 = vmatprep.subr.mxu0 0.0
    %50 = vmatpush1.msra.mxu0 %v32
    %51 = vmatprep.subr.mxu0 0.0
    %52 = vmatpush1.msra.mxu0 %v33
    %53 = vmatprep.subr.mxu0 0.0
    %54 = vmatpush1.msra.mxu0 0.0
    %55 = vmatprep.subr.mxu0 0.0
    %56 = vmatpush1.msra.mxu0 0.0
    %57 = vmatprep.subr.mxu0 0.0
    %58 = vmatpush1.msra.mxu0 0.0
    %59 = vmatprep.subr.mxu0 0.0
    %60 = vmatpush1.msra.mxu0 0.0
    %61 = vmatprep.subr.mxu0 0.0
    %62 = vmatpush1.msra.mxu0 0.0
    %63 = vmatprep.subr.mxu0 0.0
    %64 = vmatpush1.msra.mxu0 0.0
    %65 = vmatprep.subr.mxu0 0.0
    %66 = vmatpush1.msra.mxu0 0.0
    %67 = vmatprep.subr.mxu0 0.0
    %68 = vmatpush1.msra.mxu0 0.0
    %69 = vmatprep.subr.mxu0 0.0
    %70 = vmatpush1.msra.mxu0 0.0
    %71 = vmatprep.subr.mxu0 0.0
    %72 = vmatpush1.msra.mxu0 0.0
    %73 = vmatprep.subr.mxu0 0.0
    %74 = vmatpush1.msra.mxu0 0.0
    %75 = vmatprep.subr.mxu0 0.0
    %76 = vmatpush1.msra.mxu0 0.0
    %77 = vmatprep.subr.mxu0 0.0
    %78 = vmatpush1.msra.mxu0 0.0
    %79 = vmatprep.subr.mxu0 0.0
    %80 = vmatpush1.msra.mxu0 0.0
    %81 = vmatprep.subr.mxu0 0.0
    %82 = vmatpush1.msra.mxu0 0.0
    %83 = vmatprep.subr.mxu0 0.0
    %84 = vmatpush1.msra.mxu0 0.0
    %85 = vmatprep.subr.mxu0 0.0
    %86 = vmatpush1.msra.mxu0 0.0
    %87 = vmatprep.subr.mxu0 0.0
    %88 = vmatpush1.msra.mxu0 0.0
    %89 = vmatprep.subr.mxu0 0.0
    %90 = vmatpush1.msra.mxu0 0.0
    %91 = vmatprep.subr.mxu0 0.0
    %92 = vmatpush1.msra.mxu0 0.0
    %93 = vmatprep.subr.mxu0 0.0
    %94 = vmatpush1.msra.mxu0 0.0
    %95 = vmatprep.subr.mxu0 0.0
    %96 = vmatpush1.msra.mxu0 0.0
    %97 = vmatprep.subr.mxu0 0.0
    %98 = vmatpush1.msra.mxu0 0.0
    %99 = vmatprep.subr.mxu0 0.0
    %100 = vmatpush1.msra.mxu0 0.0
    %101 = vmatprep.subr.mxu0 0.0
    %102 = vmatpush1.msra.mxu0 0.0
    %103 = vmatprep.subr.mxu0 0.0
    %104 = vmatpush1.msra.mxu0 0.0
    %105 = vmatprep.subr.mxu0 0.0
    %106 = vmatpush1.msra.mxu0 0.0
    %107 = vmatprep.subr.mxu0 0.0
    %108 = vmatpush1.msra.mxu0 0.0
    %109 = vmatprep.mubr.f32.mxu0 0.0
    %110 = vmatmul.mubr.f32.gmra.mrb[0].mxu0 %v43
    %v111 = vpop.f32.mrb[0].mxu0
    %v112 = vadd.f32 %v39, %v111
    %v113 = vpop.f32.mrb[0].mxu0
    %114 = vdwg.mxu0
    %v115 = vmax.f32 %v112, 0.0
    %v116 = vld [vmem:[%s3] sm:$0xff]
    %v117 = vld [vmem:[%s3 + $0x8] sm:$0xff]
    %v118 = vld [vmem:[%s3 + $0x10] sm:$0xff]
    %v119 = vld [vmem:[%s3 + $0x18] sm:$0xff]
    %v120 = vld [vmem:[%s3 + $0x20] sm:$0xff]
    %v121 = vld [vmem:[%s3 + $0x28] sm:$0xff]
    %v122 = vld [vmem:[%s3 + $0x30] sm:$0xff]
    %v123 = vld [vmem:[%s3 + $0x38] sm:$0xff]
    %v124 = vld [vmem:[%s4] sm:$0x1]
    %v126 = vlaneseq
    %v127 = vshrl.u32 %v126, 7
    %v128 = vsub.s32 0, %v127
    %v129 = vrot.slane %v124, %v128
    %vm131 = vcmask 523264
    %v133 = vsel %vm131, %v115, 0
    %135 = vmatprep.subr.mxu0 0.0
    %136 = vmatpush1.msra.mxu0 %v116
    %137 = vmatprep.subr.mxu0 0.0
    %138 = vmatpush1.msra.mxu0 %v117
    %139 = vmatprep.subr.mxu0 0.0
    %140 = vmatpush1.msra.mxu0 %v118
    %141 = vmatprep.subr.mxu0 0.0
    %142 = vmatpush1.msra.mxu0 %v119
    %143 = vmatprep.subr.mxu0 0.0
    %144 = vmatpush1.msra.mxu0 %v120
    %145 = vmatprep.subr.mxu0 0.0
    %146 = vmatpush1.msra.mxu0 %v121
    %147 = vmatprep.subr.mxu0 0.0
    %148 = vmatpush1.msra.mxu0 %v122
    %149 = vmatprep.subr.mxu0 0.0
    %150 = vmatpush1.msra.mxu0 %v123
    %151 = vmatprep.subr.mxu0 0.0
    %152 = vmatpush1.msra.mxu0 0.0
    %153 = vmatprep.subr.mxu0 0.0
    %154 = vmatpush1.msra.mxu0 0.0
    %155 = vmatprep.subr.mxu0 0.0
    %156 = vmatpush1.msra.mxu0 0.0
    %157 = vmatprep.subr.mxu0 0.0
    %158 = vmatpush1.msra.mxu0 0.0
    %159 = vmatprep.subr.mxu0 0.0
    %160 = vmatpush1.msra.mxu0 0.0
    %161 = vmatprep.subr.mxu0 0.0
    %162 = vmatpush1.msra.mxu0 0.0
    %163 = vmatprep.subr.mxu0 0.0
    %164 = vmatpush1.msra.mxu0 0.0
    %165 = vmatprep.subr.mxu0 0.0
    %166 = vmatpush1.msra.mxu0 0.0
    %167 = vmatprep.subr.mxu0 0.0
    %168 = vmatpush1.msra.mxu0 0.0
    %169 = vmatprep.subr.mxu0 0.0
    %170 = vmatpush1.msra.mxu0 0.0
    %171 = vmatprep.subr.mxu0 0.0
    %172 = vmatpush1.msra.mxu0 0.0
    %173 = vmatprep.subr.mxu0 0.0
    %174 = vmatpush1.msra.mxu0 0.0
    %175 = vmatprep.subr.mxu0 0.0
    %176 = vmatpush1.msra.mxu0 0.0
    %177 = vmatprep.subr.mxu0 0.0
    %178 = vmatpush1.msra.mxu0 0.0
    %179 = vmatprep.subr.mxu0 0.0
    %180 = vmatpush1.msra.mxu0 0.0
    %181 = vmatprep.subr.mxu0 0.0
    %182 = vmatpush1.msra.mxu0 0.0
    %183 = vmatprep.subr.mxu0 0.0
    %184 = vmatpush1.msra.mxu0 0.0
    %185 = vmatprep.subr.mxu0 0.0
    %186 = vmatpush1.msra.mxu0 0.0
    %187 = vmatprep.subr.mxu0 0.0
    %188 = vmatpush1.msra.mxu0 0.0
    %189 = vmatprep.subr.mxu0 0.0
    %190 = vmatpush1.msra.mxu0 0.0
    %191 = vmatprep.subr.mxu0 0.0
    %192 = vmatpush1.msra.mxu0 0.0
    %193 = vmatprep.subr.mxu0 0.0
    %194 = vmatpush1.msra.mxu0 0.0
    %195 = vmatprep.subr.mxu0 0.0
    %196 = vmatpush1.msra.mxu0 0.0
    %197 = vmatprep.subr.mxu0 0.0
    %198 = vmatpush1.msra.mxu0 0.0
    %199 = vmatprep.mubr.f32.mxu0 0.0
    %200 = vmatmul.mubr.f32.gmra.mrb[0].mxu0 %v133
    %v201 = vpop.f32.mrb[0].mxu0
    %v202 = vadd.f32 %v129, %v201
    %v203 = vpop.f32.mrb[0].mxu0
    %204 = vdwg.mxu0
    %v205 = vmax.f32 %v202, 0.0
    %v206 = vld [vmem:[%s5] sm:$0x1]
    %v207 = vld [vmem:[#allocation2] sm:$0x1]
    %209 = vset.pattern.permute.xlu0 0
    %210 = vperm.xlu0 %209, %v207
    %v211 = vpop.permute.xlu0 %210
    %v213 = vlaneseq
    %v214 = vshrl.u32 %v213, 7
    %v215 = vsub.s32 0, %v214
    %v216 = vrot.slane %v211, %v215
    %v218 = vsel %vm41, %v206, 0
    %v221 = vsel %vm41, %v205, 0
    %223 = vmatprep.subr.mxu0 0.0
    %224 = vmatpush1.xpose.msra.mxu0 %v221
    %225 = vmatprep.subr.mxu0 0.0
    %226 = vmatpush1.xpose.msra.mxu0 0.0
    %227 = vmatprep.subr.mxu0 0.0
    %228 = vmatpush1.xpose.msra.mxu0 0.0
    %229 = vmatprep.subr.mxu0 0.0
    %230 = vmatpush1.xpose.msra.mxu0 0.0
    %231 = vmatprep.subr.mxu0 0.0
    %232 = vmatpush1.xpose.msra.mxu0 0.0
    %233 = vmatprep.subr.mxu0 0.0
    %234 = vmatpush1.xpose.msra.mxu0 0.0
    %235 = vmatprep.subr.mxu0 0.0
    %236 = vmatpush1.xpose.msra.mxu0 0.0
    %237 = vmatprep.subr.mxu0 0.0
    %238 = vmatpush1.xpose.msra.mxu0 0.0
    %239 = vmatprep.subr.mxu0 0.0
    %240 = vmatpush1.xpose.msra.mxu0 0.0
    %241 = vmatprep.subr.mxu0 0.0
    %242 = vmatpush1.xpose.msra.mxu0 0.0
    %243 = vmatprep.subr.mxu0 0.0
    %244 = vmatpush1.xpose.msra.mxu0 0.0
    %245 = vmatprep.subr.mxu0 0.0
    %246 = vmatpush1.xpose.msra.mxu0 0.0
    %247 = vmatprep.subr.mxu0 0.0
    %248 = vmatpush1.xpose.msra.mxu0 0.0
    %249 = vmatprep.subr.mxu0 0.0
    %250 = vmatpush1.xpose.msra.mxu0 0.0
    %251 = vmatprep.subr.mxu0 0.0
    %252 = vmatpush1.xpose.msra.mxu0 0.0
    %253 = vmatprep.subr.mxu0 0.0
    %254 = vmatpush1.xpose.msra.mxu0 0.0
    %255 = vmatprep.subr.mxu0 0.0
    %256 = vmatpush1.xpose.msra.mxu0 0.0
    %257 = vmatprep.subr.mxu0 0.0
    %258 = vmatpush1.xpose.msra.mxu0 0.0
    %259 = vmatprep.subr.mxu0 0.0
    %260 = vmatpush1.xpose.msra.mxu0 0.0
    %261 = vmatprep.subr.mxu0 0.0
    %262 = vmatpush1.xpose.msra.mxu0 0.0
    %263 = vmatprep.subr.mxu0 0.0
    %264 = vmatpush1.xpose.msra.mxu0 0.0
    %265 = vmatprep.subr.mxu0 0.0
    %266 = vmatpush1.xpose.msra.mxu0 0.0
    %267 = vmatprep.subr.mxu0 0.0
    %268 = vmatpush1.xpose.msra.mxu0 0.0
    %269 = vmatprep.subr.mxu0 0.0
    %270 = vmatpush1.xpose.msra.mxu0 0.0
    %271 = vmatprep.subr.mxu0 0.0
    %272 = vmatpush1.xpose.msra.mxu0 0.0
    %273 = vmatprep.subr.mxu0 0.0
    %274 = vmatpush1.xpose.msra.mxu0 0.0
    %275 = vmatprep.subr.mxu0 0.0
    %276 = vmatpush1.xpose.msra.mxu0 0.0
    %277 = vmatprep.subr.mxu0 0.0
    %278 = vmatpush1.xpose.msra.mxu0 0.0
    %279 = vmatprep.subr.mxu0 0.0
    %280 = vmatpush1.xpose.msra.mxu0 0.0
    %281 = vmatprep.subr.mxu0 0.0
    %282 = vmatpush1.xpose.msra.mxu0 0.0
    %283 = vmatprep.subr.mxu0 0.0
    %284 = vmatpush1.xpose.msra.mxu0 0.0
    %285 = vmatprep.subr.mxu0 0.0
    %286 = vmatpush1.xpose.msra.mxu0 0.0
    %287 = vmatprep.mubr.f32.mxu0 0.0
    %288 = vmatmul.mubr.f32.gmra.mrb[0].mxu0 %v218
    %v289 = vpop.f32.mrb[0].mxu0
    %v290 = vadd.f32 %v216, %v289
    %v291 = vpop.f32.mrb[0].mxu0
    %292 = vdwg.mxu0
    %vm293 = vcmask 57344
    %294 = vst.msk [vmem:[#allocation3] sm:$0x1] %vm293, %v290
    // Predicated region
    $region30: #{tpu_custom_call.1} parent=1 // pred_check
      _
    $region31: #{tpu_custom_call.1} parent=1 // pred_check_branch
      %296 = sbr.rel (0) target = $region33
    $region32: #{tpu_custom_call.1} parent=1 // pred_region
      %s298 = ssub.s32 16, 16
      %299 = vsyncadd [#allocation4], %s298
      %s301 = sshll.u32 [#allocation3], 4
      %s302 = int_to_ptr.vmem [resolvable:$true] %s301
      %304 = dma.vmem_to_hbm [thread:$0]  %s302, 16, %s7, [#allocation4]
    $region33: #{tpu_custom_call.1} parent=1 // pred_fallthru
      _
    // Predicated region
    $region34: #{tpu_custom_call.1} parent=1 // pred_check
      _
    $region35: #{tpu_custom_call.1} parent=1 // pred_check_branch
      %306 = sbr.rel (0) target = $region37
    $region36: #{tpu_custom_call.1} parent=1 // pred_region
      %307 = dma.done [#allocation4], 16
    $region37: #{tpu_custom_call.1} parent=1 // pred_fallthru
      _
    %308 = vsyncpa [#allocation4], 1

</llo_original>
